<compile_context>
chip_gen: v7x
topology: tpu7x:2x2x1
jax: 0.10.0
libtpu: 0.0.40
codegen_flags: <defaults>
</compile_context>

<pallas_src>
import functools

import jax
import jax.numpy as jnp
from jax.experimental import pallas as pl
from jax.experimental.pallas import tpu as pltpu

EPS = 1e-5
LANE = 128


def _round_up(n, m):
    return (n + m - 1) // m * m


def _pad2d(a, rows, cols):
    return jnp.pad(a, ((0, rows - a.shape[0]), (0, cols - a.shape[1])))


# --------------------------------------------------------------- kernel ----
def _batchnet_kernel(x_ref,
                     w1_ref, g1_ref, be1_ref,
                     w2_ref, g2_ref, be2_ref,
                     w3_ref, b3_ref,
                     o_ref):
    inv_b = 1.0 / x_ref.shape[0]  # static true batch size (no batch padding)

    def bn_relu_bf16(h, g_ref, be_ref):
        # Single-pass batch stats (f32 sum / sumsq), BN folded into one
        # per-feature FMA; result handed back already in bf16 so the f32
        # activation copy dies here.  Elementwise math stays f32 (v5e-safe).
        s = jnp.sum(h, axis=0, keepdims=True)
        ss = jnp.sum(h * h, axis=0, keepdims=True)
        mean = s * inv_b
        var = jnp.maximum(ss * inv_b - mean * mean, 0.0)   # biased var, train mode
        scale = g_ref[...] * jax.lax.rsqrt(var + EPS)      # EUP rsqrt
        shift = be_ref[...] - mean * scale
        return jnp.maximum(h * scale + shift, 0.0).astype(jnp.bfloat16)

    # ----- layer1: Linear (bias exactly cancelled by train-mode BN) -> BN -> ReLU
    h = jnp.dot(x_ref[...].astype(jnp.bfloat16), w1_ref[...],
                preferred_element_type=jnp.float32)
    h = bn_relu_bf16(h, g1_ref, be1_ref)

    # ----- layer2: Linear (bias cancelled by BN) -> BN -> ReLU
    h = jnp.dot(h, w2_ref[...], preferred_element_type=jnp.float32)
    h = bn_relu_bf16(h, g2_ref, be2_ref)

    # ----- layer3: Linear (bias kept)
    out = jnp.dot(h, w3_ref[...], preferred_element_type=jnp.float32) + b3_ref[...]
    o_ref[...] = out.astype(o_ref.dtype)


# --------------------------------------------------------------- params ----
def init_params(key, in_dim, n_hidden_1, n_hidden_2, out_dim):
    """Deterministic init mimicking nn.Linear default (uniform +-1/sqrt(fan_in)).
    Weights stored already transposed to (in, out)."""
    ks = jax.random.split(key, 6)

    def linear(kw, kb, fan_in, fan_out):
        bound = 1.0 / jnp.sqrt(jnp.float32(fan_in))
        w = jax.random.uniform(kw, (fan_in, fan_out), jnp.float32, -bound, bound)
        b = jax.random.uniform(kb, (1, fan_out), jnp.float32, -bound, bound)
        return w, b

    w1, b1 = linear(ks[0], ks[1], in_dim, n_hidden_1)
    w2, b2 = linear(ks[2], ks[3], n_hidden_1, n_hidden_2)
    w3, b3 = linear(ks[4], ks[5], n_hidden_2, out_dim)

    return {
        "w1": w1, "b1": b1,
        "g1": jnp.ones((1, n_hidden_1), jnp.float32),    # BatchNorm1d weight
        "be1": jnp.zeros((1, n_hidden_1), jnp.float32),  # BatchNorm1d bias
        "w2": w2, "b2": b2,
        "g2": jnp.ones((1, n_hidden_2), jnp.float32),
        "be2": jnp.zeros((1, n_hidden_2), jnp.float32),
        "w3": w3, "b3": b3,
    }


def prepare_params(params):
    """ONE-TIME pad + bf16 cast of the parameters (hoisted out of the per-call
    path).  Padded BN features get gamma=beta=0 so they stay exactly 0; padded
    weight rows/cols are zero so the math is exact.  b1/b2 are intentionally
    dropped: a Linear bias followed by train-mode BatchNorm is exactly
    cancelled by the mean subtraction."""
    in_dim, h1 = params["w1"].shape
    h2 = params["w2"].shape[1]
    out_dim = params["w3"].shape[1]

    pi = _round_up(in_dim, LANE)
    p1 = _round_up(h1, LANE)
    p2 = _round_up(h2, LANE)
    po = _round_up(out_dim, LANE)

    prepped = {
        "w1": _pad2d(params["w1"], pi, p1).astype(jnp.bfloat16),
        "g1": _pad2d(params["g1"], 1, p1),
        "be1": _pad2d(params["be1"], 1, p1),
        "w2": _pad2d(params["w2"], p1, p2).astype(jnp.bfloat16),
        "g2": _pad2d(params["g2"], 1, p2),
        "be2": _pad2d(params["be2"], 1, p2),
        "w3": _pad2d(params["w3"], p2, po).astype(jnp.bfloat16),
        "b3": _pad2d(params["b3"], 1, po),
    }
    # Materialize now so the padding/casting never re-runs per call.
    prepped = {k: jax.block_until_ready(v) for k, v in prepped.items()}
    return prepped, out_dim


# -------------------------------------------------------------- forward ----
@functools.partial(jax.jit, static_argnames=("out_dim",))
def batchnet_forward(x, prepped, *, out_dim):
    """x: (B, in_dim) float32.  prepped: dict from prepare_params."""
    B = x.shape[0]
    pi, p1 = prepped["w1"].shape
    p2 = prepped["w2"].shape[1]
    po = prepped["w3"].shape[1]

    # Pad x (f32) to the lane-aligned input width; this single cheap pad is the
    # only per-call prep op and it lives inside the jit.  The bf16 cast happens
    # inside the kernel.
    xp = _pad2d(x, B, pi)

    # Whole-batch-resident VMEM footprint (no grid, no double-buffering).
    # v7x is the binding generation (64 MiB physical / 32 MiB scoped VMEM).
    est_bytes = (B * pi * 4                                             # x (f32)
                 + sum(v.size * v.dtype.itemsize for v in prepped.values())
                 + B * po * 4                                           # out (f32)
                 + 4 * B * max(p1, p2) * 4)                             # activations
    assert est_bytes <= 32 * 1024 * 1024, (
        "whole-batch-resident footprint exceeds v7x scoped VMEM; "
        "switch to the batch-tiled two-pass-BN grid variant")

    args = (xp,
            prepped["w1"], prepped["g1"], prepped["be1"],
            prepped["w2"], prepped["g2"], prepped["be2"],
            prepped["w3"], prepped["b3"])

    vmem_spec = pl.BlockSpec(memory_space=pltpu.MemorySpace.VMEM)

    out_padded = pl.pallas_call(
        _batchnet_kernel,
        out_shape=jax.ShapeDtypeStruct((B, po), jnp.float32),
        in_specs=[vmem_spec] * len(args),
        out_specs=vmem_spec,
        compiler_params=pltpu.CompilerParams(
            vmem_limit_bytes=int(max(2 * est_bytes, 4 * 1024 * 1024))),
    )(*args)

    return out_padded[:, :out_dim]


# ------------------------------------------------------------ reference ----
def _reference_forward(x, p):
    """PyTorch-semantics reference (Linear+bias -> train-mode BN -> ReLU, x2,
    Linear).  MXU operands rounded to bf16 (as the kernel does) so the
    comparison is tight; biases ARE applied here to confirm the kernel's
    bias-dropping is exact."""
    def bf(a):
        return a.astype(jnp.bfloat16).astype(jnp.float32)

    def bn(h, g, be):
        m = h.mean(0, keepdims=True)
        v = ((h - m) ** 2).mean(0, keepdims=True)  # biased variance (train mode)
        return (h - m) * jax.lax.rsqrt(v + EPS) * g + be

    h = bf(x) @ bf(p["w1"]) + p["b1"]
    h = jnp.maximum(bn(h, p["g1"], p["be1"]), 0.0)
    h = bf(h) @ bf(p["w2"]) + p["b2"]
    h = jnp.maximum(bn(h, p["g2"], p["be2"]), 0.0)
    return bf(h) @ bf(p["w3"]) + p["b3"]


if __name__ == "__main__":
    key = jax.random.PRNGKey(0)
    k_x, k_p = jax.random.split(key)

    B, in_dim, n_hidden_1, n_hidden_2, out_dim = 8, 32, 64, 64, 16

    x = jax.random.normal(k_x, (B, in_dim), dtype=jnp.float32)
    params = init_params(k_p, in_dim, n_hidden_1, n_hidden_2, out_dim)
    prepped, out_dim_static = prepare_params(params)   # one-time pad + cast

    out = jax.block_until_ready(
        batchnet_forward(x, prepped, out_dim=out_dim_static))
    ref = _reference_forward(x, params)

    assert out.shape == (B, out_dim)
    assert jnp.allclose(out, ref, atol=2e-3, rtol=2e-3), \
        float(jnp.max(jnp.abs(out - ref)))

    # TODO(synk): BatchNorm1d running_mean/running_var buffer updates (training
    # side effects) are not modeled; forward uses batch statistics as PyTorch
    # does in train mode.
    print("KERNEL_OK")
</pallas_src>

<mosaic_0001>
module attributes {stable_mosaic.version = 11 : i64} {
  func.func @_batchnet_kernel(%arg0: memref<8x128xf32, #tpu.memory_space<vmem>>, %arg1: memref<128x128xbf16, #tpu.memory_space<vmem>>, %arg2: memref<1x128xf32, #tpu.memory_space<vmem>>, %arg3: memref<1x128xf32, #tpu.memory_space<vmem>>, %arg4: memref<128x128xbf16, #tpu.memory_space<vmem>>, %arg5: memref<1x128xf32, #tpu.memory_space<vmem>>, %arg6: memref<1x128xf32, #tpu.memory_space<vmem>>, %arg7: memref<128x128xbf16, #tpu.memory_space<vmem>>, %arg8: memref<1x128xf32, #tpu.memory_space<vmem>>, %arg9: memref<8x128xf32, #tpu.memory_space<vmem>>) attributes {dimension_semantics = [], scalar_prefetch = 0 : i64, scratch_operands = 0 : i64, tpu.core_type = #tpu.core_type<tc>} {
    %c0 = arith.constant 0 : index
    %c0_0 = arith.constant 0 : index
    %0 = vector.load %arg0[%c0, %c0_0] : memref<8x128xf32, #tpu.memory_space<vmem>>, vector<8x128xf32>
    %1 = arith.truncf %0 : vector<8x128xf32> to vector<8x128xbf16>
    %c0_1 = arith.constant 0 : index
    %c0_2 = arith.constant 0 : index
    %2 = vector.load %arg1[%c0_1, %c0_2] : memref<128x128xbf16, #tpu.memory_space<vmem>>, vector<128x128xbf16>
    %cst = arith.constant dense<0.000000e+00> : vector<8x128xf32>
    %3 = tpu.matmul %1, %2, %cst {dimension_numbers = #tpu.dot_dimension_numbers<[1], [0], [0], [1], [0, 0, 1, 1], [], []>} : vector<8x128xbf16>, vector<128x128xbf16>, vector<8x128xf32> -> vector<8x128xf32>
    %cst_3 = arith.constant dense<0.000000e+00> : vector<128xf32>
    %4 = vector.multi_reduction <add>, %3, %cst_3 [0] : vector<8x128xf32> to vector<128xf32>
    %5 = vector.shape_cast %4 : vector<128xf32> to vector<1x128xf32>
    %6 = arith.mulf %3, %3 : vector<8x128xf32>
    %cst_4 = arith.constant dense<0.000000e+00> : vector<128xf32>
    %7 = vector.multi_reduction <add>, %6, %cst_4 [0] : vector<8x128xf32> to vector<128xf32>
    %8 = vector.shape_cast %7 : vector<128xf32> to vector<1x128xf32>
    %cst_5 = arith.constant 1.250000e-01 : f32
    %9 = vector.broadcast %cst_5 : f32 to vector<1x128xf32>
    %10 = arith.mulf %5, %9 : vector<1x128xf32>
    %cst_6 = arith.constant 1.250000e-01 : f32
    %11 = vector.broadcast %cst_6 : f32 to vector<1x128xf32>
    %12 = arith.mulf %8, %11 : vector<1x128xf32>
    %13 = arith.mulf %10, %10 : vector<1x128xf32>
    %14 = arith.subf %12, %13 : vector<1x128xf32>
    %cst_7 = arith.constant 0.000000e+00 : f32
    %15 = vector.broadcast %cst_7 : f32 to vector<1x128xf32>
    %16 = arith.maximumf %14, %15 : vector<1x128xf32>
    %c0_8 = arith.constant 0 : index
    %c0_9 = arith.constant 0 : index
    %17 = vector.load %arg2[%c0_8, %c0_9] : memref<1x128xf32, #tpu.memory_space<vmem>>, vector<1x128xf32>
    %cst_10 = arith.constant 9.99999974E-6 : f32
    %18 = vector.broadcast %cst_10 : f32 to vector<1x128xf32>
    %19 = arith.addf %16, %18 : vector<1x128xf32>
    %20 = math.rsqrt %19 : vector<1x128xf32>
    %21 = arith.mulf %17, %20 : vector<1x128xf32>
    %c0_11 = arith.constant 0 : index
    %c0_12 = arith.constant 0 : index
    %22 = vector.load %arg3[%c0_11, %c0_12] : memref<1x128xf32, #tpu.memory_space<vmem>>, vector<1x128xf32>
    %23 = arith.mulf %10, %21 : vector<1x128xf32>
    %24 = arith.subf %22, %23 : vector<1x128xf32>
    %25 = vector.broadcast %21 : vector<1x128xf32> to vector<8x128xf32>
    %26 = arith.mulf %3, %25 : vector<8x128xf32>
    %27 = vector.broadcast %24 : vector<1x128xf32> to vector<8x128xf32>
    %28 = arith.addf %26, %27 : vector<8x128xf32>
    %cst_13 = arith.constant 0.000000e+00 : f32
    %29 = vector.broadcast %cst_13 : f32 to vector<8x128xf32>
    %30 = arith.maximumf %28, %29 : vector<8x128xf32>
    %31 = arith.truncf %30 : vector<8x128xf32> to vector<8x128xbf16>
    %c0_14 = arith.constant 0 : index
    %c0_15 = arith.constant 0 : index
    %32 = vector.load %arg4[%c0_14, %c0_15] : memref<128x128xbf16, #tpu.memory_space<vmem>>, vector<128x128xbf16>
    %cst_16 = arith.constant dense<0.000000e+00> : vector<8x128xf32>
    %33 = tpu.matmul %31, %32, %cst_16 {dimension_numbers = #tpu.dot_dimension_numbers<[1], [0], [0], [1], [0, 0, 1, 1], [], []>} : vector<8x128xbf16>, vector<128x128xbf16>, vector<8x128xf32> -> vector<8x128xf32>
    %cst_17 = arith.constant dense<0.000000e+00> : vector<128xf32>
    %34 = vector.multi_reduction <add>, %33, %cst_17 [0] : vector<8x128xf32> to vector<128xf32>
    %35 = vector.shape_cast %34 : vector<128xf32> to vector<1x128xf32>
    %36 = arith.mulf %33, %33 : vector<8x128xf32>
    %cst_18 = arith.constant dense<0.000000e+00> : vector<128xf32>
    %37 = vector.multi_reduction <add>, %36, %cst_18 [0] : vector<8x128xf32> to vector<128xf32>
    %38 = vector.shape_cast %37 : vector<128xf32> to vector<1x128xf32>
    %cst_19 = arith.constant 1.250000e-01 : f32
    %39 = vector.broadcast %cst_19 : f32 to vector<1x128xf32>
    %40 = arith.mulf %35, %39 : vector<1x128xf32>
    %cst_20 = arith.constant 1.250000e-01 : f32
    %41 = vector.broadcast %cst_20 : f32 to vector<1x128xf32>
    %42 = arith.mulf %38, %41 : vector<1x128xf32>
    %43 = arith.mulf %40, %40 : vector<1x128xf32>
    %44 = arith.subf %42, %43 : vector<1x128xf32>
    %cst_21 = arith.constant 0.000000e+00 : f32
    %45 = vector.broadcast %cst_21 : f32 to vector<1x128xf32>
    %46 = arith.maximumf %44, %45 : vector<1x128xf32>
    %c0_22 = arith.constant 0 : index
    %c0_23 = arith.constant 0 : index
    %47 = vector.load %arg5[%c0_22, %c0_23] : memref<1x128xf32, #tpu.memory_space<vmem>>, vector<1x128xf32>
    %cst_24 = arith.constant 9.99999974E-6 : f32
    %48 = vector.broadcast %cst_24 : f32 to vector<1x128xf32>
    %49 = arith.addf %46, %48 : vector<1x128xf32>
    %50 = math.rsqrt %49 : vector<1x128xf32>
    %51 = arith.mulf %47, %50 : vector<1x128xf32>
    %c0_25 = arith.constant 0 : index
    %c0_26 = arith.constant 0 : index
    %52 = vector.load %arg6[%c0_25, %c0_26] : memref<1x128xf32, #tpu.memory_space<vmem>>, vector<1x128xf32>
    %53 = arith.mulf %40, %51 : vector<1x128xf32>
    %54 = arith.subf %52, %53 : vector<1x128xf32>
    %55 = vector.broadcast %51 : vector<1x128xf32> to vector<8x128xf32>
    %56 = arith.mulf %33, %55 : vector<8x128xf32>
    %57 = vector.broadcast %54 : vector<1x128xf32> to vector<8x128xf32>
    %58 = arith.addf %56, %57 : vector<8x128xf32>
    %cst_27 = arith.constant 0.000000e+00 : f32
    %59 = vector.broadcast %cst_27 : f32 to vector<8x128xf32>
    %60 = arith.maximumf %58, %59 : vector<8x128xf32>
    %61 = arith.truncf %60 : vector<8x128xf32> to vector<8x128xbf16>
    %c0_28 = arith.constant 0 : index
    %c0_29 = arith.constant 0 : index
    %62 = vector.load %arg7[%c0_28, %c0_29] : memref<128x128xbf16, #tpu.memory_space<vmem>>, vector<128x128xbf16>
    %cst_30 = arith.constant dense<0.000000e+00> : vector<8x128xf32>
    %63 = tpu.matmul %61, %62, %cst_30 {dimension_numbers = #tpu.dot_dimension_numbers<[1], [0], [0], [1], [0, 0, 1, 1], [], []>} : vector<8x128xbf16>, vector<128x128xbf16>, vector<8x128xf32> -> vector<8x128xf32>
    %c0_31 = arith.constant 0 : index
    %c0_32 = arith.constant 0 : index
    %64 = vector.load %arg8[%c0_31, %c0_32] : memref<1x128xf32, #tpu.memory_space<vmem>>, vector<1x128xf32>
    %65 = vector.broadcast %64 : vector<1x128xf32> to vector<8x128xf32>
    %66 = arith.addf %63, %65 : vector<8x128xf32>
    %c0_33 = arith.constant 0 : index
    %c0_34 = arith.constant 0 : index
    %67 = vector.load %arg9[%c0_33, %c0_34] : memref<8x128xf32, #tpu.memory_space<vmem>>, vector<8x128xf32>
    tpu.vector_store %arg9[%c0_33, %c0_34], %66 {strides = array<i32>} : memref<8x128xf32, #tpu.memory_space<vmem>>, vector<8x128xf32>,
    return
  }
}

</mosaic_0001>

<llo_original>
// kernel: batchnet_forward.1
$region0: #{batchnet_forward.1}
  #allocation0 [shape = 'u32[]', space=smem, size = 0x4, offset = 0x4, fixed_abs, tag = 'smem constant byte address 0x4 - core index']
  #allocation1 [shape = 'u32[144,128]{1,0:T(1,128)}', space=vmem, size = 0x12000, scoped, tag = 'internal scratch']
  %s0 = inlined_call_operand.vmem [shape: f32[8,128], index: 0, kind: input, shape index: {}]
  %s1 = inlined_call_operand.hbm [shape: bf16[128,128], index: 1, kind: input, shape index: {}]
  %s2 = inlined_call_operand.vmem [shape: f32[1,128], index: 2, kind: input, shape index: {}]
  %s3 = inlined_call_operand.vmem [shape: f32[1,128], index: 3, kind: input, shape index: {}]
  %s4 = inlined_call_operand.hbm [shape: bf16[128,128], index: 4, kind: input, shape index: {}]
  %s5 = inlined_call_operand.vmem [shape: f32[1,128], index: 5, kind: input, shape index: {}]
  %s6 = inlined_call_operand.vmem [shape: f32[1,128], index: 6, kind: input, shape index: {}]
  %s7 = inlined_call_operand.hbm [shape: bf16[128,128], index: 7, kind: input, shape index: {}]
  %s8 = inlined_call_operand.vmem [shape: f32[1,128], index: 8, kind: input, shape index: {}]
  %s9 = inlined_call_operand.hbm [shape: f32[8,128], index: 9, kind: output, shape index: {}]
  %s10 = sld [smem:[#allocation0]]
  $region58: #{batchnet_forward.1} parent=0
    _
  %s12 = ssub.s32 1, %s10
  %s13 = scalar_select 0, %s12, %s10
  $region1: #{batchnet_forward.1} parent=0
    #allocation2 [shape = 'u8[32768]{0}', space=vmem, size = 0x8000, scoped, tag = 'input window, operand 1, single buffered']
    #allocation3 [shape = 's32[1]{0}', space=sflag, size = 0x4, scoped, tag = 'scoped memory for batchnet_forward.1']
    #allocation4 [shape = 's32[1]{0}', space=sflag, size = 0x4, scoped, tag = 'scoped memory for batchnet_forward.1']
    #allocation5 [shape = 'u8[32768]{0}', space=vmem, size = 0x8000, scoped, tag = 'input window, operand 4, single buffered']
    #allocation6 [shape = 's32[1]{0}', space=sflag, size = 0x4, scoped, tag = 'scoped memory for batchnet_forward.1']
    #allocation7 [shape = 'u8[32768]{0}', space=vmem, size = 0x8000, scoped, tag = 'input window, operand 7, single buffered']
    #allocation8 [shape = 'u8[4096]{0}', space=vmem, size = 0x1000, scoped, tag = 'output window, operand 0, single buffered']
    %14 = vsyncpa [#allocation3], 0
    %15 = vsyncpa [#allocation6], 0
    %16 = vsyncpa [#allocation4], 0
    // Predicated region
    $region2: #{batchnet_forward.1} parent=1 // pred_check
      _
    $region3: #{batchnet_forward.1} parent=1 // pred_check_branch
      %18 = sbr.rel (0) target = $region5
    $region4: #{batchnet_forward.1} parent=1 // pred_region
      _
    $region5: #{batchnet_forward.1} parent=1 // pred_fallthru
      _
    // Predicated region
    $region6: #{batchnet_forward.1} parent=1 // pred_check
      _
    $region7: #{batchnet_forward.1} parent=1 // pred_check_branch
      %20 = sbr.rel (0) target = $region9
    $region8: #{batchnet_forward.1} parent=1 // pred_region
      %s22 = ssub.s32 1024, 1024
      %23 = vsyncadd [#allocation3], %s22
      %s24 = sshll.u32 [#allocation2], 4
      %s25 = int_to_ptr.vmem [resolvable:$true] %s24
      %30 = dma.hbm_to_vmem [thread:$0]  %s1, 1024, %s25, [#allocation3], 64, 64, 4
    $region9: #{batchnet_forward.1} parent=1 // pred_fallthru
      _
    // Predicated region
    $region10: #{batchnet_forward.1} parent=1 // pred_check
      _
    $region11: #{batchnet_forward.1} parent=1 // pred_check_branch
      %32 = sbr.rel (0) target = $region13
    $region12: #{batchnet_forward.1} parent=1 // pred_region
      _
    $region13: #{batchnet_forward.1} parent=1 // pred_fallthru
      _
    // Predicated region
    $region14: #{batchnet_forward.1} parent=1 // pred_check
      _
    $region15: #{batchnet_forward.1} parent=1 // pred_check_branch
      %34 = sbr.rel (0) target = $region17
    $region16: #{batchnet_forward.1} parent=1 // pred_region
      _
    $region17: #{batchnet_forward.1} parent=1 // pred_fallthru
      _
    // Predicated region
    $region18: #{batchnet_forward.1} parent=1 // pred_check
      _
    $region19: #{batchnet_forward.1} parent=1 // pred_check_branch
      %36 = sbr.rel (0) target = $region21
    $region20: #{batchnet_forward.1} parent=1 // pred_region
      %s38 = ssub.s32 1024, 1024
      %39 = vsyncadd [#allocation6], %s38
      %s40 = sshll.u32 [#allocation5], 4
      %s41 = int_to_ptr.vmem [resolvable:$true] %s40
      %46 = dma.hbm_to_vmem [thread:$0]  %s4, 1024, %s41, [#allocation6], 64, 64, 4
    $region21: #{batchnet_forward.1} parent=1 // pred_fallthru
      _
    // Predicated region
    $region22: #{batchnet_forward.1} parent=1 // pred_check
      _
    $region23: #{batchnet_forward.1} parent=1 // pred_check_branch
      %48 = sbr.rel (0) target = $region25
    $region24: #{batchnet_forward.1} parent=1 // pred_region
      _
    $region25: #{batchnet_forward.1} parent=1 // pred_fallthru
      _
    // Predicated region
    $region26: #{batchnet_forward.1} parent=1 // pred_check
      _
    $region27: #{batchnet_forward.1} parent=1 // pred_check_branch
      %50 = sbr.rel (0) target = $region29
    $region28: #{batchnet_forward.1} parent=1 // pred_region
      _
    $region29: #{batchnet_forward.1} parent=1 // pred_fallthru
      _
    // Predicated region
    $region30: #{batchnet_forward.1} parent=1 // pred_check
      _
    $region31: #{batchnet_forward.1} parent=1 // pred_check_branch
      %52 = sbr.rel (0) target = $region33
    $region32: #{batchnet_forward.1} parent=1 // pred_region
      %s54 = ssub.s32 1024, 1024
      %55 = vsyncadd [#allocation6], %s54
      %s56 = sshll.u32 [#allocation7], 4
      %s57 = int_to_ptr.vmem [resolvable:$true] %s56
      %62 = dma.hbm_to_vmem [thread:$0]  %s7, 1024, %s57, [#allocation6], 64, 64, 4
    $region33: #{batchnet_forward.1} parent=1 // pred_fallthru
      _
    // Predicated region
    $region34: #{batchnet_forward.1} parent=1 // pred_check
      _
    $region35: #{batchnet_forward.1} parent=1 // pred_check_branch
      %64 = sbr.rel (0) target = $region37
    $region36: #{batchnet_forward.1} parent=1 // pred_region
      _
    $region37: #{batchnet_forward.1} parent=1 // pred_fallthru
      _
    // Predicated region
    $region38: #{batchnet_forward.1} parent=1 // pred_check
      _
    $region39: #{batchnet_forward.1} parent=1 // pred_check_branch
      %66 = sbr.rel (0) target = $region41
    $region40: #{batchnet_forward.1} parent=1 // pred_region
      %67 = dma.done [#allocation3], 1024
    $region41: #{batchnet_forward.1} parent=1 // pred_fallthru
      _
    // Predicated region
    $region42: #{batchnet_forward.1} parent=1 // pred_check
      _
    $region43: #{batchnet_forward.1} parent=1 // pred_check_branch
      %69 = sbr.rel (0) target = $region45
    $region44: #{batchnet_forward.1} parent=1 // pred_region
      %70 = dma.done [#allocation6], 1024
    $region45: #{batchnet_forward.1} parent=1 // pred_fallthru
      _
    // Predicated region
    $region46: #{batchnet_forward.1} parent=1 // pred_check
      _
    $region47: #{batchnet_forward.1} parent=1 // pred_check_branch
      %72 = sbr.rel (0) target = $region49
    $region48: #{batchnet_forward.1} parent=1 // pred_region
      %73 = dma.done [#allocation6], 1024
    $region49: #{batchnet_forward.1} parent=1 // pred_fallthru
      _
    %v75 = vld [vmem:[%s0] sm:$0xff]
    %v76 = vpack.c.bf16 %v75, %v75
    %v77 = vld [vmem:[#allocation2] sm:$0xf]
    %v78 = vld [vmem:[#allocation2 + $0x4] sm:$0xf]
    %v79 = vld [vmem:[#allocation2 + $0x8] sm:$0xf]
    %v80 = vld [vmem:[#allocation2 + $0xc] sm:$0xf]
    %v81 = vld [vmem:[#allocation2 + $0x10] sm:$0xf]
    %v82 = vld [vmem:[#allocation2 + $0x14] sm:$0xf]
    %v83 = vld [vmem:[#allocation2 + $0x18] sm:$0xf]
    %v84 = vld [vmem:[#allocation2 + $0x1c] sm:$0xf]
    %v85 = vld [vmem:[#allocation2 + $0x20] sm:$0xf]
    %v86 = vld [vmem:[#allocation2 + $0x24] sm:$0xf]
    %v87 = vld [vmem:[#allocation2 + $0x28] sm:$0xf]
    %v88 = vld [vmem:[#allocation2 + $0x2c] sm:$0xf]
    %v89 = vld [vmem:[#allocation2 + $0x30] sm:$0xf]
    %v90 = vld [vmem:[#allocation2 + $0x34] sm:$0xf]
    %v91 = vld [vmem:[#allocation2 + $0x38] sm:$0xf]
    %v92 = vld [vmem:[#allocation2 + $0x3c] sm:$0xf]
    %v109 = vunpack.c.l.b16 %v77
    %v110 = vunpack.c.l.b16 %v78
    %v111 = vunpack.c.l.b16 %v79
    %v112 = vunpack.c.l.b16 %v80
    %v113 = vunpack.c.l.b16 %v81
    %v114 = vunpack.c.l.b16 %v82
    %v115 = vunpack.c.l.b16 %v83
    %v116 = vunpack.c.l.b16 %v84
    %v117 = vunpack.c.l.b16 %v85
    %v118 = vunpack.c.l.b16 %v86
    %v119 = vunpack.c.l.b16 %v87
    %v120 = vunpack.c.l.b16 %v88
    %v121 = vunpack.c.l.b16 %v89
    %v122 = vunpack.c.l.b16 %v90
    %v123 = vunpack.c.l.b16 %v91
    %v124 = vunpack.c.l.b16 %v92
    %v125 = vpack.c.b16 %v110, %v109
    %v126 = vpack.c.b16 %v112, %v111
    %v127 = vpack.c.b16 %v114, %v113
    %v128 = vpack.c.b16 %v116, %v115
    %v129 = vpack.c.b16 %v118, %v117
    %v130 = vpack.c.b16 %v120, %v119
    %v131 = vpack.c.b16 %v122, %v121
    %v132 = vpack.c.b16 %v124, %v123
    %141 = vmatprep.subr.bf16.mxu0 0
    %142 = vmatpush1.bf16.msra.mxu0 %v125
    %143 = vmatprep.subr.bf16.mxu0 0
    %144 = vmatpush1.bf16.msra.mxu0 %v126
    %145 = vmatprep.subr.bf16.mxu0 0
    %146 = vmatpush1.bf16.msra.mxu0 %v127
    %147 = vmatprep.subr.bf16.mxu0 0
    %148 = vmatpush1.bf16.msra.mxu0 %v128
    %149 = vmatprep.subr.bf16.mxu0 0
    %150 = vmatpush1.bf16.msra.mxu0 %v129
    %151 = vmatprep.subr.bf16.mxu0 0
    %152 = vmatpush1.bf16.msra.mxu0 %v130
    %153 = vmatprep.subr.bf16.mxu0 0
    %154 = vmatpush1.bf16.msra.mxu0 %v131
    %155 = vmatprep.subr.bf16.mxu0 0
    %156 = vmatpush1.bf16.msra.mxu0 %v132
    %157 = vmatprep.subr.bf16.mxu0 0
    %158 = vmatpush1.bf16.msra.mxu0 0
    %159 = vmatprep.subr.bf16.mxu0 0
    %160 = vmatpush1.bf16.msra.mxu0 0
    %161 = vmatprep.subr.bf16.mxu0 0
    %162 = vmatpush1.bf16.msra.mxu0 0
    %163 = vmatprep.subr.bf16.mxu0 0
    %164 = vmatpush1.bf16.msra.mxu0 0
    %165 = vmatprep.subr.bf16.mxu0 0
    %166 = vmatpush1.bf16.msra.mxu0 0
    %167 = vmatprep.subr.bf16.mxu0 0
    %168 = vmatpush1.bf16.msra.mxu0 0
    %169 = vmatprep.subr.bf16.mxu0 0
    %170 = vmatpush1.bf16.msra.mxu0 0
    %171 = vmatprep.subr.bf16.mxu0 0
    %172 = vmatpush1.bf16.msra.mxu0 0
    %173 = vmatprep.mubr.bf16.mxu0 0
    %174 = vmatmul.mubr.bf16.gmra.mrb[0].mxu0 %v76
    %v175 = vpop.f32.mrb[0].mxu0
    %v176 = vadd.f32 0.0, %v175
    %v177 = vpop.f32.mrb[0].mxu0
    %v178 = vpop.f32.mrb[0].mxu0
    %v179 = vpop.f32.mrb[0].mxu0
    %180 = vdwg.mxu0
    %v181 = vrot.slane %v176, 4
    %v182 = vadd.f32 %v176, %v181
    %v183 = vrot.slane %v182, 2
    %v184 = vadd.f32 %v182, %v183
    %v185 = vrot.slane %v184, 1
    %v186 = vadd.f32 %v184, %v185
    %v187 = vmul.f32 %v176, %v176
    %v188 = vrot.slane %v187, 4
    %v189 = vadd.f32 %v187, %v188
    %v190 = vrot.slane %v189, 2
    %v191 = vadd.f32 %v189, %v190
    %v192 = vrot.slane %v191, 1
    %v193 = vadd.f32 %v191, %v192
    %v194 = vmul.f32 %v186, 0.125
    %v195 = vmul.f32 %v193, 0.125
    %v196 = vmul.f32 %v194, %v194
    %v197 = vsub.f32 %v195, %v196
    %v198 = vmax.f32 %v197, 0.0
    %v199 = vld [vmem:[%s2] sm:$0x1]
    %v200 = vadd.f32 %v198, 1e-05
    %v201 = vrsqrt.pop %v200
    %v202 = vmul.f32 %v199, %v201
    %v203 = vld [vmem:[%s3] sm:$0x1]
    %v204 = vmul.f32 %v194, %v202
    %v205 = vsub.f32 %v203, %v204
    %v207 = vlaneseq
    %v208 = vshrl.u32 %v207, 7
    %v209 = vsub.s32 0, %v208
    %v210 = vrot.slane %v202, %v209
    %v212 = vmul.f32 %v176, %v210
    %v214 = vlaneseq
    %v215 = vshrl.u32 %v214, 7
    %v216 = vsub.s32 0, %v215
    %v217 = vrot.slane %v205, %v216
    %v219 = vadd.f32 %v212, %v217
    %v220 = vmax.f32 %v219, 0.0
    %v221 = vpack.c.bf16 %v220, %v220
    %v222 = vld [vmem:[#allocation5] sm:$0xf]
    %v223 = vld [vmem:[#allocation5 + $0x4] sm:$0xf]
    %v224 = vld [vmem:[#allocation5 + $0x8] sm:$0xf]
    %v225 = vld [vmem:[#allocation5 + $0xc] sm:$0xf]
    %v226 = vld [vmem:[#allocation5 + $0x10] sm:$0xf]
    %v227 = vld [vmem:[#allocation5 + $0x14] sm:$0xf]
    %v228 = vld [vmem:[#allocation5 + $0x18] sm:$0xf]
    %v229 = vld [vmem:[#allocation5 + $0x1c] sm:$0xf]
    %v230 = vld [vmem:[#allocation5 + $0x20] sm:$0xf]
    %v231 = vld [vmem:[#allocation5 + $0x24] sm:$0xf]
    %v232 = vld [vmem:[#allocation5 + $0x28] sm:$0xf]
    %v233 = vld [vmem:[#allocation5 + $0x2c] sm:$0xf]
    %v234 = vld [vmem:[#allocation5 + $0x30] sm:$0xf]
    %v235 = vld [vmem:[#allocation5 + $0x34] sm:$0xf]
    %v236 = vld [vmem:[#allocation5 + $0x38] sm:$0xf]
    %v237 = vld [vmem:[#allocation5 + $0x3c] sm:$0xf]
    %v254 = vunpack.c.l.b16 %v222
    %v255 = vunpack.c.l.b16 %v223
    %v256 = vunpack.c.l.b16 %v224
    %v257 = vunpack.c.l.b16 %v225
    %v258 = vunpack.c.l.b16 %v226
    %v259 = vunpack.c.l.b16 %v227
    %v260 = vunpack.c.l.b16 %v228
    %v261 = vunpack.c.l.b16 %v229
    %v262 = vunpack.c.l.b16 %v230
    %v263 = vunpack.c.l.b16 %v231
    %v264 = vunpack.c.l.b16 %v232
    %v265 = vunpack.c.l.b16 %v233
    %v266 = vunpack.c.l.b16 %v234
    %v267 = vunpack.c.l.b16 %v235
    %v268 = vunpack.c.l.b16 %v236
    %v269 = vunpack.c.l.b16 %v237
    %v270 = vpack.c.b16 %v255, %v254
    %v271 = vpack.c.b16 %v257, %v256
    %v272 = vpack.c.b16 %v259, %v258
    %v273 = vpack.c.b16 %v261, %v260
    %v274 = vpack.c.b16 %v263, %v262
    %v275 = vpack.c.b16 %v265, %v264
    %v276 = vpack.c.b16 %v267, %v266
    %v277 = vpack.c.b16 %v269, %v268
    %286 = vmatprep.subr.bf16.mxu0 0
    %287 = vmatpush1.bf16.msra.mxu0 %v270
    %288 = vmatprep.subr.bf16.mxu0 0
    %289 = vmatpush1.bf16.msra.mxu0 %v271
    %290 = vmatprep.subr.bf16.mxu0 0
    %291 = vmatpush1.bf16.msra.mxu0 %v272
    %292 = vmatprep.subr.bf16.mxu0 0
    %293 = vmatpush1.bf16.msra.mxu0 %v273
    %294 = vmatprep.subr.bf16.mxu0 0
    %295 = vmatpush1.bf16.msra.mxu0 %v274
    %296 = vmatprep.subr.bf16.mxu0 0
    %297 = vmatpush1.bf16.msra.mxu0 %v275
    %298 = vmatprep.subr.bf16.mxu0 0
    %299 = vmatpush1.bf16.msra.mxu0 %v276
    %300 = vmatprep.subr.bf16.mxu0 0
    %301 = vmatpush1.bf16.msra.mxu0 %v277
    %302 = vmatprep.subr.bf16.mxu0 0
    %303 = vmatpush1.bf16.msra.mxu0 0
    %304 = vmatprep.subr.bf16.mxu0 0
    %305 = vmatpush1.bf16.msra.mxu0 0
    %306 = vmatprep.subr.bf16.mxu0 0
    %307 = vmatpush1.bf16.msra.mxu0 0
    %308 = vmatprep.subr.bf16.mxu0 0
    %309 = vmatpush1.bf16.msra.mxu0 0
    %310 = vmatprep.subr.bf16.mxu0 0
    %311 = vmatpush1.bf16.msra.mxu0 0
    %312 = vmatprep.subr.bf16.mxu0 0
    %313 = vmatpush1.bf16.msra.mxu0 0
    %314 = vmatprep.subr.bf16.mxu0 0
    %315 = vmatpush1.bf16.msra.mxu0 0
    %316 = vmatprep.subr.bf16.mxu0 0
    %317 = vmatpush1.bf16.msra.mxu0 0
    %318 = vmatprep.mubr.bf16.mxu0 0
    %319 = vmatmul.mubr.bf16.gmra.mrb[0].mxu0 %v221
    %v320 = vpop.f32.mrb[0].mxu0
    %v321 = vadd.f32 0.0, %v320
    %v322 = vpop.f32.mrb[0].mxu0
    %v323 = vpop.f32.mrb[0].mxu0
    %v324 = vpop.f32.mrb[0].mxu0
    %325 = vdwg.mxu0
    %v326 = vrot.slane %v321, 4
    %v327 = vadd.f32 %v321, %v326
    %v328 = vrot.slane %v327, 2
    %v329 = vadd.f32 %v327, %v328
    %v330 = vrot.slane %v329, 1
    %v331 = vadd.f32 %v329, %v330
    %v332 = vmul.f32 %v321, %v321
    %v333 = vrot.slane %v332, 4
    %v334 = vadd.f32 %v332, %v333
    %v335 = vrot.slane %v334, 2
    %v336 = vadd.f32 %v334, %v335
    %v337 = vrot.slane %v336, 1
    %v338 = vadd.f32 %v336, %v337
    %v339 = vmul.f32 %v331, 0.125
    %v340 = vmul.f32 %v338, 0.125
    %v341 = vmul.f32 %v339, %v339
    %v342 = vsub.f32 %v340, %v341
    %v343 = vmax.f32 %v342, 0.0
    %v344 = vld [vmem:[%s5] sm:$0x1]
    %v345 = vadd.f32 %v343, 1e-05
    %v346 = vrsqrt.pop %v345
    %v347 = vmul.f32 %v344, %v346
    %v348 = vld [vmem:[%s6] sm:$0x1]
    %v349 = vmul.f32 %v339, %v347
    %v350 = vsub.f32 %v348, %v349
    %v352 = vlaneseq
    %v353 = vshrl.u32 %v352, 7
    %v354 = vsub.s32 0, %v353
    %v355 = vrot.slane %v347, %v354
    %v357 = vmul.f32 %v321, %v355
    %v359 = vlaneseq
    %v360 = vshrl.u32 %v359, 7
    %v361 = vsub.s32 0, %v360
    %v362 = vrot.slane %v350, %v361
    %v364 = vadd.f32 %v357, %v362
    %v365 = vmax.f32 %v364, 0.0
    %v366 = vpack.c.bf16 %v365, %v365
    %v367 = vld [vmem:[#allocation7] sm:$0xf]
    %v368 = vld [vmem:[#allocation7 + $0x4] sm:$0xf]
    %v369 = vld [vmem:[#allocation7 + $0x8] sm:$0xf]
    %v370 = vld [vmem:[#allocation7 + $0xc] sm:$0xf]
    %v371 = vld [vmem:[#allocation7 + $0x10] sm:$0xf]
    %v372 = vld [vmem:[#allocation7 + $0x14] sm:$0xf]
    %v373 = vld [vmem:[#allocation7 + $0x18] sm:$0xf]
    %v374 = vld [vmem:[#allocation7 + $0x1c] sm:$0xf]
    %v375 = vld [vmem:[#allocation7 + $0x20] sm:$0xf]
    %v376 = vld [vmem:[#allocation7 + $0x24] sm:$0xf]
    %v377 = vld [vmem:[#allocation7 + $0x28] sm:$0xf]
    %v378 = vld [vmem:[#allocation7 + $0x2c] sm:$0xf]
    %v379 = vld [vmem:[#allocation7 + $0x30] sm:$0xf]
    %v380 = vld [vmem:[#allocation7 + $0x34] sm:$0xf]
    %v381 = vld [vmem:[#allocation7 + $0x38] sm:$0xf]
    %v382 = vld [vmem:[#allocation7 + $0x3c] sm:$0xf]
    %v383 = vld [vmem:[%s8] sm:$0x1]
    %v385 = vlaneseq
    %v386 = vshrl.u32 %v385, 7
    %v387 = vsub.s32 0, %v386
    %v388 = vrot.slane %v383, %v387
    %v406 = vunpack.c.l.b16 %v367
    %v407 = vunpack.c.l.b16 %v368
    %v408 = vunpack.c.l.b16 %v369
    %v409 = vunpack.c.l.b16 %v370
    %v410 = vunpack.c.l.b16 %v371
    %v411 = vunpack.c.l.b16 %v372
    %v412 = vunpack.c.l.b16 %v373
    %v413 = vunpack.c.l.b16 %v374
    %v414 = vunpack.c.l.b16 %v375
    %v415 = vunpack.c.l.b16 %v376
    %v416 = vunpack.c.l.b16 %v377
    %v417 = vunpack.c.l.b16 %v378
    %v418 = vunpack.c.l.b16 %v379
    %v419 = vunpack.c.l.b16 %v380
    %v420 = vunpack.c.l.b16 %v381
    %v421 = vunpack.c.l.b16 %v382
    %v422 = vpack.c.b16 %v407, %v406
    %v423 = vpack.c.b16 %v409, %v408
    %v424 = vpack.c.b16 %v411, %v410
    %v425 = vpack.c.b16 %v413, %v412
    %v426 = vpack.c.b16 %v415, %v414
    %v427 = vpack.c.b16 %v417, %v416
    %v428 = vpack.c.b16 %v419, %v418
    %v429 = vpack.c.b16 %v421, %v420
    %438 = vmatprep.subr.bf16.mxu0 0
    %439 = vmatpush1.bf16.msra.mxu0 %v422
    %440 = vmatprep.subr.bf16.mxu0 0
    %441 = vmatpush1.bf16.msra.mxu0 %v423
    %442 = vmatprep.subr.bf16.mxu0 0
    %443 = vmatpush1.bf16.msra.mxu0 %v424
    %444 = vmatprep.subr.bf16.mxu0 0
    %445 = vmatpush1.bf16.msra.mxu0 %v425
    %446 = vmatprep.subr.bf16.mxu0 0
    %447 = vmatpush1.bf16.msra.mxu0 %v426
    %448 = vmatprep.subr.bf16.mxu0 0
    %449 = vmatpush1.bf16.msra.mxu0 %v427
    %450 = vmatprep.subr.bf16.mxu0 0
    %451 = vmatpush1.bf16.msra.mxu0 %v428
    %452 = vmatprep.subr.bf16.mxu0 0
    %453 = vmatpush1.bf16.msra.mxu0 %v429
    %454 = vmatprep.subr.bf16.mxu0 0
    %455 = vmatpush1.bf16.msra.mxu0 0
    %456 = vmatprep.subr.bf16.mxu0 0
    %457 = vmatpush1.bf16.msra.mxu0 0
    %458 = vmatprep.subr.bf16.mxu0 0
    %459 = vmatpush1.bf16.msra.mxu0 0
    %460 = vmatprep.subr.bf16.mxu0 0
    %461 = vmatpush1.bf16.msra.mxu0 0
    %462 = vmatprep.subr.bf16.mxu0 0
    %463 = vmatpush1.bf16.msra.mxu0 0
    %464 = vmatprep.subr.bf16.mxu0 0
    %465 = vmatpush1.bf16.msra.mxu0 0
    %466 = vmatprep.subr.bf16.mxu0 0
    %467 = vmatpush1.bf16.msra.mxu0 0
    %468 = vmatprep.subr.bf16.mxu0 0
    %469 = vmatpush1.bf16.msra.mxu0 0
    %470 = vmatprep.mubr.bf16.mxu0 0
    %471 = vmatmul.mubr.bf16.gmra.mrb[0].mxu0 %v366
    %v472 = vpop.f32.mrb[0].mxu0
    %v473 = vadd.f32 %v388, %v472
    %v474 = vpop.f32.mrb[0].mxu0
    %v475 = vpop.f32.mrb[0].mxu0
    %v476 = vpop.f32.mrb[0].mxu0
    %477 = vdwg.mxu0
    %478 = vst [vmem:[#allocation8] sm:$0xff] %v473
    // Predicated region
    $region50: #{batchnet_forward.1} parent=1 // pred_check
      _
    $region51: #{batchnet_forward.1} parent=1 // pred_check_branch
      %480 = sbr.rel (0) target = $region53
    $region52: #{batchnet_forward.1} parent=1 // pred_region
      %s482 = ssub.s32 128, 128
      %483 = vsyncadd [#allocation4], %s482
      %s485 = sshll.u32 [#allocation8], 4
      %s486 = int_to_ptr.vmem [resolvable:$true] %s485
      %488 = dma.vmem_to_hbm [thread:$0]  %s486, 128, %s9, [#allocation4]
    $region53: #{batchnet_forward.1} parent=1 // pred_fallthru
      _
    // Predicated region
    $region54: #{batchnet_forward.1} parent=1 // pred_check
      _
    $region55: #{batchnet_forward.1} parent=1 // pred_check_branch
      %490 = sbr.rel (0) target = $region57
    $region56: #{batchnet_forward.1} parent=1 // pred_region
      %491 = dma.done [#allocation4], 128
    $region57: #{batchnet_forward.1} parent=1 // pred_fallthru
      _
    %492 = vsyncpa [#allocation3], 1
    %493 = vsyncpa [#allocation6], 1
    %494 = vsyncpa [#allocation4], 1

</llo_original>
